<compile_context>
chip_gen: v6e
topology: v6e:2x2x1
jax: 0.10.0
libtpu: 0.0.40
codegen_flags: <defaults>
</compile_context>

<pallas_src>
import functools

import jax
import jax.numpy as jnp
from jax.experimental import pallas as pl
from jax.experimental.pallas import tpu as pltpu

# Deterministic "parameters" of the module (from __init__).
WEIGHT = 0.5
EPS = 1e-3

_LANES = 128
_SUBLANES = 8
_MAX_CORE_SLICES = 2  # leading "parallel" grid axis; sharded across TCs on v7x


def _charbonnier_kernel(x_ref, y_ref, out_ref, acc_ref, *, eps2, num_slices,
                        tiles_per_core, n_tiles, tile_rows, n_valid_rows_last):
    c = pl.program_id(0)          # core-slice index
    i = pl.program_id(1)          # tile index within the slice
    g = c * tiles_per_core + i    # global tile index
    last_i = pl.num_programs(1) - 1

    @pl.when(i == 0)
    def _init():
        acc_ref[...] = jnp.zeros_like(acc_ref)

    x = x_ref[...].astype(jnp.float32)
    y = y_ref[...].astype(jnp.float32)
    d = x - y
    val = jnp.sqrt(d * d + jnp.float32(eps2))

    def accumulate(v):
        # (r, 128) -> (r//8, 8, 128): fold across vregs with pure VALU adds
        # (co-issue with the loads); the single cross-lane reduction happens
        # in the wrapper on the tiny (num_slices, 8, 128) output.
        acc_ref[...] += v.reshape(-1, _SUBLANES, _LANES).sum(axis=0)

    has_partial_tail = n_valid_rows_last != tile_rows        # static bool
    needs_range_guard = num_slices * tiles_per_core != n_tiles  # static bool

    if has_partial_tail:
        @pl.when(g < n_tiles - 1)
        def _steady():
            accumulate(val)

        @pl.when(g == n_tiles - 1)
        def _tail():
            # No lane padding, so validity is a whole-row, compile-time
            # boundary: accumulate the full sublane slabs via static slices
            # and mask only the single ragged (8, 128) slab.
            nfull = (n_valid_rows_last // _SUBLANES) * _SUBLANES
            if nfull:
                accumulate(val[:nfull])
            ragged = n_valid_rows_last - nfull
            if ragged:
                slab = val[nfull:nfull + _SUBLANES]
                row = jax.lax.broadcasted_iota(jnp.int32, (_SUBLANES, _LANES), 0)
                acc_ref[...] += jnp.where(row < ragged, slab, 0.0)
    elif needs_range_guard:
        # Grid overshoots n_tiles by < num_slices steps (odd tile count).
        @pl.when(g < n_tiles)
        def _steady():
            accumulate(val)
    else:
        accumulate(val)

    @pl.when(i == last_i)
    def _finalize():
        out_ref[...] = acc_ref[...].reshape(1, _SUBLANES, _LANES)


def _default_tile_rows(itemsize):
    # Block bytes per input per grid step: ~4 MiB on v7x (3.2 TB/s HBM makes
    # the 0.35us/step overhead worth ~1.1 MB of streaming), ~2 MiB elsewhere
    # (keeps the f32 double-buffered footprint at 8 MiB, inside v5e's 16 MiB
    # scoped-VMEM default).
    kind = ""
    try:
        kind = jax.devices()[0].device_kind.lower()
    except Exception:  # pragma: no cover - defensive, e.g. no devices yet
        pass
    target = (4 << 20) if ("v7" in kind or "7x" in kind) else (2 << 20)
    return max(_SUBLANES, target // (_LANES * itemsize))


def charbonnier_loss(pred, gt, *, weight=WEIGHT, eps=EPS, tile_rows=None):
    """weight * mean(sqrt((pred - gt)^2 + eps^2)), computed by a Pallas kernel."""
    assert pred.shape == gt.shape
    total = int(pred.size)
    assert total > 0
    itemsize = jnp.dtype(pred.dtype).itemsize
    eps = float(eps)
    eps2 = eps * eps
    scale = float(weight) / float(total)

    x = pred.reshape(-1)
    y = gt.reshape(-1)

    # Lane-dense main body: rows * 128 elements go through the kernel.  The
    # (<128-element) remainder is added by a tiny pure-JAX expression below,
    # so there is never a full-tensor pad/copy in HBM.
    rows = total // _LANES
    rem = total - rows * _LANES

    def _tail_sum():
        if rem == 0:
            return jnp.float32(0.0)
        dx = x[rows * _LANES:].astype(jnp.float32) - y[rows * _LANES:].astype(jnp.float32)
        return jnp.sum(jnp.sqrt(dx * dx + jnp.float32(eps2)))

    if rows == 0:
        # Fewer than 128 elements: not worth a kernel launch.
        return jnp.float32(scale) * _tail_sum()

    xm = x[: rows * _LANES].reshape(rows, _LANES)
    ym = y[: rows * _LANES].reshape(rows, _LANES)

    # Sub-32-bit dtypes pack 2/4 rows per sublane: keep blocks on whole native
    # (8,128)/(16,128)/(32,128) tiles so packed loads stay unmasked.
    row_align = _SUBLANES * max(1, 4 // itemsize)
    if tile_rows is None:
        tile_rows = _default_tile_rows(itemsize)
    rows_up = int(pl.cdiv(rows, row_align)) * row_align
    tile_rows = max(row_align, min(int(tile_rows), rows_up))
    tile_rows = (tile_rows // row_align) * row_align

    n_tiles = int(pl.cdiv(rows, tile_rows))
    num_slices = min(_MAX_CORE_SLICES, n_tiles)
    tiles_per_core = int(pl.cdiv(n_tiles, num_slices))
    n_valid_rows_last = rows - (n_tiles - 1) * tile_rows

    if num_slices * tiles_per_core == n_tiles:
        in_map = lambda c, i: (c * tiles_per_core + i, 0)
    else:
        # Grid overshoots n_tiles (odd tile count): clamp the block index so
        # the extra steps re-read a valid tile; the kernel skips accumulating.
        in_map = lambda c, i: (jnp.minimum(c * tiles_per_core + i, n_tiles - 1), 0)

    kernel = functools.partial(
        _charbonnier_kernel,
        eps2=eps2,
        num_slices=int(num_slices),
        tiles_per_core=int(tiles_per_core),
        n_tiles=int(n_tiles),
        tile_rows=int(tile_rows),
        n_valid_rows_last=int(n_valid_rows_last),
    )

    partials = pl.pallas_call(
        kernel,
        out_shape=jax.ShapeDtypeStruct((num_slices, _SUBLANES, _LANES), jnp.float32),
        grid_spec=pltpu.PrefetchScalarGridSpec(
            num_scalar_prefetch=0,
            grid=(num_slices, tiles_per_core),
            in_specs=[
                pl.BlockSpec((tile_rows, _LANES), in_map),
                pl.BlockSpec((tile_rows, _LANES), in_map),
            ],
            out_specs=pl.BlockSpec((1, _SUBLANES, _LANES), lambda c, i: (c, 0, 0)),
            scratch_shapes=[pltpu.VMEM((_SUBLANES, _LANES), jnp.float32)],
        ),
        compiler_params=pltpu.CompilerParams(
            dimension_semantics=("parallel", "arbitrary"),
        ),
        cost_estimate=pl.CostEstimate(
            flops=4 * total,
            transcendentals=total,
            bytes_accessed=2 * total * itemsize
            + num_slices * _SUBLANES * _LANES * 4,
        ),
    )(xm, ym)

    # Single-pass f32 accumulation across (8,128) slots is ample for image-
    # sized tensors; for >~1e9 elements consider a pairwise finalize.
    kernel_sum = jnp.sum(partials)
    return jnp.float32(scale) * (kernel_sum + _tail_sum())


def _ref_loss(pred, gt, weight=WEIGHT, eps=EPS):
    d = pred.astype(jnp.float32) - gt.astype(jnp.float32)
    return jnp.float32(weight) * jnp.mean(jnp.sqrt(d * d + jnp.float32(eps * eps)))


if __name__ == "__main__":
    key = jax.random.PRNGKey(0)

    # 1) Canonical NCHW case implied by the module's forward (pred / gt).
    k1, k2 = jax.random.split(key)
    pred = jax.random.normal(k1, (2, 4, 16, 16), dtype=jnp.float32)
    gt = jax.random.normal(k2, (2, 4, 16, 16), dtype=jnp.float32)
    loss = jax.block_until_ready(charbonnier_loss(pred, gt))
    ref = _ref_loss(pred, gt)
    assert jnp.allclose(loss, ref, rtol=1e-5, atol=1e-6), (loss, ref)

    # 2) Lane-unaligned + ragged-row tail (exercises the wrapper remainder and
    #    the static-slice tail mask).
    k3, k4 = jax.random.split(k1)
    a = jax.random.normal(k3, (3, 5, 7, 11), dtype=jnp.float32)
    b = jax.random.normal(k4, (3, 5, 7, 11), dtype=jnp.float32)
    loss2 = jax.block_until_ready(charbonnier_loss(a, b))
    ref2 = _ref_loss(a, b)
    assert jnp.allclose(loss2, ref2, rtol=1e-5, atol=1e-6), (loss2, ref2)

    # 3) Multi-tile, odd tile count + partial last tile (clamped index_map,
    #    range guard, dual-slice reduction).
    k5, k6 = jax.random.split(k2)
    c = jax.random.normal(k5, (38405,), dtype=jnp.float32)
    d = jax.random.normal(k6, (38405,), dtype=jnp.float32)
    loss3 = jax.block_until_ready(charbonnier_loss(c, d, tile_rows=64))
    ref3 = _ref_loss(c, d)
    assert jnp.allclose(loss3, ref3, rtol=1e-5, atol=1e-6), (loss3, ref3)

    # 4) Even multi-tile split, fully aligned (plain steady-state path).
    k7, k8 = jax.random.split(k3)
    e = jax.random.normal(k7, (1, 8, 64, 128), dtype=jnp.float32)
    f = jax.random.normal(k8, (1, 8, 64, 128), dtype=jnp.float32)
    loss4 = jax.block_until_ready(charbonnier_loss(e, f, tile_rows=128))
    ref4 = _ref_loss(e, f)
    assert jnp.allclose(loss4, ref4, rtol=1e-5, atol=1e-6), (loss4, ref4)

    # 5) bf16 inputs: in-register upcast, 16-row tile alignment.
    eb = e.astype(jnp.bfloat16)
    fb = f.astype(jnp.bfloat16)
    loss5 = jax.block_until_ready(charbonnier_loss(eb, fb))
    ref5 = _ref_loss(eb, fb)
    assert jnp.allclose(loss5, ref5, rtol=1e-5, atol=1e-6), (loss5, ref5)

    print("KERNEL_OK")
</pallas_src>

<mosaic_0001>
module attributes {stable_mosaic.version = 11 : i64} {
  func.func @_charbonnier_kernel(%arg0: i32, %arg1: i32, %arg2: memref<16x128xf32, #tpu.memory_space<vmem>>, %arg3: memref<16x128xf32, #tpu.memory_space<vmem>>, %arg4: memref<1x8x128xf32, #tpu.memory_space<vmem>>, %arg5: memref<8x128xf32, #tpu.memory_space<vmem>>) attributes {dimension_semantics = [#tpu.dimension_semantics<parallel>, #tpu.dimension_semantics<arbitrary>], iteration_bounds = array<i64: 1, 1>, scalar_prefetch = 0 : i64, scratch_operands = 1 : i64, tpu.core_type = #tpu.core_type<tc>, window_params = [{transform_indices = @transform_0, window_bounds = array<i64: 16, 128>}, {transform_indices = @transform_1, window_bounds = array<i64: 16, 128>}, {transform_indices = @transform_2, window_bounds = array<i64: 1, 8, 128>}]} {
    %c0_i32 = arith.constant 0 : i32
    %0 = arith.cmpi eq, %arg1, %c0_i32 : i32
    %1 = arith.extui %0 : i1 to i32
    %c0_i32_0 = arith.constant 0 : i32
    %2 = arith.cmpi ne, %1, %c0_i32_0 : i32
    scf.if %2 {
      %cst_11 = arith.constant 0.000000e+00 : f32
      %18 = vector.broadcast %cst_11 : f32 to vector<8x128xf32>
      %c0_12 = arith.constant 0 : index
      %c0_13 = arith.constant 0 : index
      %19 = vector.load %arg5[%c0_12, %c0_13] : memref<8x128xf32, #tpu.memory_space<vmem>>, vector<8x128xf32>
      tpu.vector_store %arg5[%c0_12, %c0_13], %18 {strides = array<i32>} : memref<8x128xf32, #tpu.memory_space<vmem>>, vector<8x128xf32>,
    } else {
    }
    %c0 = arith.constant 0 : index
    %c0_1 = arith.constant 0 : index
    %3 = vector.load %arg2[%c0, %c0_1] : memref<16x128xf32, #tpu.memory_space<vmem>>, vector<16x128xf32>
    %c0_2 = arith.constant 0 : index
    %c0_3 = arith.constant 0 : index
    %4 = vector.load %arg3[%c0_2, %c0_3] : memref<16x128xf32, #tpu.memory_space<vmem>>, vector<16x128xf32>
    %5 = arith.subf %3, %4 : vector<16x128xf32>
    %6 = arith.mulf %5, %5 : vector<16x128xf32>
    %cst = arith.constant 9.99999997E-7 : f32
    %7 = vector.broadcast %cst : f32 to vector<16x128xf32>
    %8 = arith.addf %6, %7 : vector<16x128xf32>
    %9 = math.sqrt %8 : vector<16x128xf32>
    %c0_4 = arith.constant 0 : index
    %c0_5 = arith.constant 0 : index
    %10 = vector.load %arg5[%c0_4, %c0_5] : memref<8x128xf32, #tpu.memory_space<vmem>>, vector<8x128xf32>
    %11 = vector.shape_cast %9 : vector<16x128xf32> to vector<2x8x128xf32>
    %cst_6 = arith.constant dense<0.000000e+00> : vector<8x128xf32>
    %12 = vector.multi_reduction <add>, %11, %cst_6 [0] : vector<2x8x128xf32> to vector<8x128xf32>
    %13 = arith.addf %10, %12 : vector<8x128xf32>
    %c0_7 = arith.constant 0 : index
    %c0_8 = arith.constant 0 : index
    %14 = vector.load %arg5[%c0_7, %c0_8] : memref<8x128xf32, #tpu.memory_space<vmem>>, vector<8x128xf32>
    tpu.vector_store %arg5[%c0_7, %c0_8], %13 {strides = array<i32>} : memref<8x128xf32, #tpu.memory_space<vmem>>, vector<8x128xf32>,
    %c0_i32_9 = arith.constant 0 : i32
    %15 = arith.cmpi eq, %arg1, %c0_i32_9 : i32
    %16 = arith.extui %15 : i1 to i32
    %c0_i32_10 = arith.constant 0 : i32
    %17 = arith.cmpi ne, %16, %c0_i32_10 : i32
    scf.if %17 {
      %c0_11 = arith.constant 0 : index
      %c0_12 = arith.constant 0 : index
      %18 = vector.load %arg5[%c0_11, %c0_12] : memref<8x128xf32, #tpu.memory_space<vmem>>, vector<8x128xf32>
      %19 = vector.shape_cast %18 : vector<8x128xf32> to vector<1x8x128xf32>
      %c0_13 = arith.constant 0 : index
      %c0_14 = arith.constant 0 : index
      %c0_15 = arith.constant 0 : index
      %20 = vector.load %arg4[%c0_13, %c0_14, %c0_15] : memref<1x8x128xf32, #tpu.memory_space<vmem>>, vector<1x8x128xf32>
      tpu.vector_store %arg4[%c0_13, %c0_14, %c0_15], %19 {strides = array<i32>} : memref<1x8x128xf32, #tpu.memory_space<vmem>>, vector<1x8x128xf32>,
    } else {
    }
    return
  }
  func.func @transform_0(%arg0: i32, %arg1: i32) -> (i32, i32) {
    %c1_i32 = arith.constant 1 : i32
    %0 = arith.muli %arg0, %c1_i32 : i32
    %1 = arith.addi %0, %arg1 : i32
    %c0_i32 = arith.constant 0 : i32
    %c0_i32_0 = arith.constant 0 : i32
    return %1, %c0_i32 : i32, i32
  }
  func.func @transform_1(%arg0: i32, %arg1: i32) -> (i32, i32) {
    %c1_i32 = arith.constant 1 : i32
    %0 = arith.muli %arg0, %c1_i32 : i32
    %1 = arith.addi %0, %arg1 : i32
    %c0_i32 = arith.constant 0 : i32
    %c0_i32_0 = arith.constant 0 : i32
    return %1, %c0_i32 : i32, i32
  }
  func.func @transform_2(%arg0: i32, %arg1: i32) -> (i32, i32, i32) {
    %c0_i32 = arith.constant 0 : i32
    %c0_i32_0 = arith.constant 0 : i32
    %c0_i32_1 = arith.constant 0 : i32
    return %arg0, %c0_i32, %c0_i32_0 : i32, i32, i32
  }
}

</mosaic_0001>

<llo_original>
// kernel: tpu_custom_call.1
$region0: #{tpu_custom_call.1}
  #allocation0 [shape = 'u32[]', space=smem, size = 0x4, offset = 0x4, fixed_abs, tag = 'smem constant byte address 0x4 - core index']
  #allocation1 [shape = 'u32[144,128]{1,0:T(1,128)}', space=vmem, size = 0x12000, scoped, tag = 'internal scratch']
  #allocation2 [shape = 'f32[8,128]{1,0:T(8,128)}', space=vmem, size = 0x1000, scoped, tag = 'scratch operand']
  %s0 = inlined_call_operand.hbm [shape: f32[16,128], index: 0, kind: input, shape index: {}]
  %s1 = inlined_call_operand.hbm [shape: f32[16,128], index: 1, kind: input, shape index: {}]
  %s2 = inlined_call_operand.hbm [shape: f32[1,8,128], index: 2, kind: output, shape index: {}]
  %s3 = sld [smem:[#allocation0]]
  $region34: #{tpu_custom_call.1} parent=0
    _
  %s5 = ssub.s32 1, %s3
  %s6 = scalar_select 0, %s5, %s3
  $region1: #{tpu_custom_call.1} parent=0
    #allocation3 [shape = 'u8[8192]{0}', space=vmem, size = 0x2000, scoped, tag = 'input window, operand 0, single buffered']
    #allocation4 [shape = 's32[1]{0}', space=sflag, size = 0x4, scoped, tag = 'scoped memory for tpu_custom_call.1']
    #allocation5 [shape = 's32[1]{0}', space=sflag, size = 0x4, scoped, tag = 'scoped memory for tpu_custom_call.1']
    #allocation6 [shape = 'u8[8192]{0}', space=vmem, size = 0x2000, scoped, tag = 'input window, operand 1, single buffered']
    #allocation7 [shape = 's32[1]{0}', space=sflag, size = 0x4, scoped, tag = 'scoped memory for tpu_custom_call.1']
    #allocation8 [shape = 'u8[4096]{0}', space=vmem, size = 0x1000, scoped, tag = 'output window, operand 0, single buffered']
    %7 = vsyncpa [#allocation4], 0
    %8 = vsyncpa [#allocation7], 0
    %9 = vsyncpa [#allocation5], 0
    // Predicated region
    $region2: #{tpu_custom_call.1} parent=1 // pred_check
      _
    $region3: #{tpu_custom_call.1} parent=1 // pred_check_branch
      %11 = sbr.rel (0) target = $region5
    $region4: #{tpu_custom_call.1} parent=1 // pred_region
      %s12 = sadd.s32 0, 0
      %s13 = smul.u32 2, %s12
      %s15 = ssub.s32 256, 256
      %16 = vsyncadd [#allocation4], %s15
      %s17 = smul.addr %s13, 128
      %s18 = scalar_lea.hbm %s0, %s17
      %s19 = sshll.u32 [#allocation3], 4
      %s20 = int_to_ptr.vmem [resolvable:$true] %s19
      %25 = dma.hbm_to_vmem [thread:$0]  %s18, 256, %s20, [#allocation4], 128, 128, 8
    $region5: #{tpu_custom_call.1} parent=1 // pred_fallthru
      _
    // Predicated region
    $region6: #{tpu_custom_call.1} parent=1 // pred_check
      _
    $region7: #{tpu_custom_call.1} parent=1 // pred_check_branch
      %27 = sbr.rel (0) target = $region9
    $region8: #{tpu_custom_call.1} parent=1 // pred_region
      %s28 = sadd.s32 0, 0
      %s29 = smul.u32 2, %s28
      %s31 = ssub.s32 256, 256
      %32 = vsyncadd [#allocation7], %s31
      %s33 = smul.addr %s29, 128
      %s34 = scalar_lea.hbm %s1, %s33
      %s35 = sshll.u32 [#allocation6], 4
      %s36 = int_to_ptr.vmem [resolvable:$true] %s35
      %41 = dma.hbm_to_vmem [thread:$0]  %s34, 256, %s36, [#allocation7], 128, 128, 8
    $region9: #{tpu_custom_call.1} parent=1 // pred_fallthru
      _
    // Predicated region
    $region10: #{tpu_custom_call.1} parent=1 // pred_check
      _
    $region11: #{tpu_custom_call.1} parent=1 // pred_check_branch
      %43 = sbr.rel (0) target = $region13
    $region12: #{tpu_custom_call.1} parent=1 // pred_region
      %44 = dma.done [#allocation4], 256
    $region13: #{tpu_custom_call.1} parent=1 // pred_fallthru
      _
    // Predicated region
    $region14: #{tpu_custom_call.1} parent=1 // pred_check
      _
    $region15: #{tpu_custom_call.1} parent=1 // pred_check_branch
      %46 = sbr.rel (0) target = $region17
    $region16: #{tpu_custom_call.1} parent=1 // pred_region
      %47 = dma.done [#allocation7], 256
    $region17: #{tpu_custom_call.1} parent=1 // pred_fallthru
      _
    %s48 = sadd.s32 0, 0
    %s49 = smul.u32 2, %s48
    %s50 = sadd.s32 0, 0
    %s51 = smul.u32 2, %s50
    %p52 = scmp.eq.s32.totalorder 0, 0
    // Predicated region
    $region18: #{tpu_custom_call.1} parent=1 // pred_check
      %p53 = pneg %p52
    $region19: #{tpu_custom_call.1} parent=1 // pred_check_branch
      %55 = sbr.rel (%p53) target = $region21
    $region20: #{tpu_custom_call.1} parent=1 // pred_region
      %56 = vst [vmem:[#allocation2] sm:$0xff] 0.0
    $region21: #{tpu_custom_call.1} parent=1 // pred_fallthru
      _
    %v57 = vld [vmem:[#allocation3] sm:$0xff]
    %v58 = vld [vmem:[#allocation3 + $0x8] sm:$0xff]
    %v59 = vld [vmem:[#allocation6] sm:$0xff]
    %v60 = vld [vmem:[#allocation6 + $0x8] sm:$0xff]
    %v61 = vsub.f32 %v57, %v59
    %v62 = vsub.f32 %v58, %v60
    %v63 = vmul.f32 %v61, %v61
    %v64 = vmul.f32 %v62, %v62
    %v65 = vadd.f32 %v63, 1e-06
    %v66 = vadd.f32 %v64, 1e-06
    %v67 = vrsqrt.pop %v65
    %v68 = vmul.f32 %v65, %v67
    %vm69 = vcmp.eq.f32.partialorder %v65, inf
    %v70 = vsel %vm69, %v65, %v68
    %vm71 = vcmp.eq.f32.partialorder %v65, 0.0
    %v72 = vand.u32 %v65, 2147483648
    %v73 = vsel %vm71, %v72, %v70
    %v74 = vrsqrt.pop %v66
    %v75 = vmul.f32 %v66, %v74
    %vm76 = vcmp.eq.f32.partialorder %v66, inf
    %v77 = vsel %vm76, %v66, %v75
    %vm78 = vcmp.eq.f32.partialorder %v66, 0.0
    %v79 = vand.u32 %v66, 2147483648
    %v80 = vsel %vm78, %v79, %v77
    %v81 = vld [vmem:[#allocation2] sm:$0xff]
    %v82 = vadd.f32 %v73, %v80
    %v83 = vadd.f32 %v81, %v82
    %84 = vst [vmem:[#allocation2] sm:$0xff] %v83
    // Predicated region
    $region22: #{tpu_custom_call.1} parent=1 // pred_check
      %p85 = pneg %p52
    $region23: #{tpu_custom_call.1} parent=1 // pred_check_branch
      %87 = sbr.rel (%p85) target = $region25
    $region24: #{tpu_custom_call.1} parent=1 // pred_region
      %v88 = vld [vmem:[#allocation2] sm:$0xff]
      %89 = vst [vmem:[#allocation8] sm:$0xff] %v88
    $region25: #{tpu_custom_call.1} parent=1 // pred_fallthru
      _
    // Predicated region
    $region26: #{tpu_custom_call.1} parent=1 // pred_check
      _
    $region27: #{tpu_custom_call.1} parent=1 // pred_check_branch
      %91 = sbr.rel (0) target = $region29
    $region28: #{tpu_custom_call.1} parent=1 // pred_region
      %s93 = ssub.s32 128, 128
      %94 = vsyncadd [#allocation5], %s93
      %s96 = sshll.u32 [#allocation8], 4
      %s97 = int_to_ptr.vmem [resolvable:$true] %s96
      %99 = dma.vmem_to_hbm [thread:$0]  %s97, 128, %s2, [#allocation5]
    $region29: #{tpu_custom_call.1} parent=1 // pred_fallthru
      _
    // Predicated region
    $region30: #{tpu_custom_call.1} parent=1 // pred_check
      _
    $region31: #{tpu_custom_call.1} parent=1 // pred_check_branch
      %101 = sbr.rel (0) target = $region33
    $region32: #{tpu_custom_call.1} parent=1 // pred_region
      %102 = dma.done [#allocation5], 128
    $region33: #{tpu_custom_call.1} parent=1 // pred_fallthru
      _
    %103 = vsyncpa [#allocation4], 1
    %104 = vsyncpa [#allocation7], 1
    %105 = vsyncpa [#allocation5], 1

</llo_original>
